<compile_context>
chip_gen: v7x
topology: tpu7x:2x2x1
jax: 0.10.0
libtpu: 0.0.40
codegen_flags: <defaults>
</compile_context>

<pallas_src>
import functools

import jax
import jax.numpy as jnp
from jax import lax
from jax.experimental import pallas as pl
from jax.experimental.pallas import tpu as pltpu

_LANES = 128
_SUBLANES = 8


def _bce_blur_kernel(pred_ref, true_ref, out_ref, *, n_valid, alpha):
    x = pred_ref[...].astype(jnp.float32)   # logits
    y = true_ref[...].astype(jnp.float32)   # targets

    # Numerically-stable elementwise BCE with logits (reduction='none'):
    #   max(x, 0) - x*y + log(1 + exp(-|x|))
    loss = jnp.maximum(x, 0.0) - x * y + jnp.log(1.0 + jnp.exp(-jnp.abs(x)))

    # Blur factor.
    p = 1.0 / (1.0 + jnp.exp(-x))            # sigmoid(pred)
    dx = p - y
    alpha_factor = 1.0 - jnp.exp((dx - 1.0) / (alpha + 1e-4))
    loss = loss * alpha_factor

    rows, cols = loss.shape
    if n_valid < rows * cols:
        # Mask out zero-padded tail elements (static decision at trace time).
        flat_idx = (lax.broadcasted_iota(jnp.int32, (rows, cols), 0) * cols
                    + lax.broadcasted_iota(jnp.int32, (rows, cols), 1))
        loss = jnp.where(flat_idx < n_valid, loss, 0.0)

    # Mean over the *valid* elements; scalar goes out via SMEM.
    out_ref[0, 0] = jnp.sum(loss) * (1.0 / n_valid)


def bce_blur_with_logits_loss(pred: jax.Array, true: jax.Array,
                              alpha: float = 0.05) -> jax.Array:
    """Pallas implementation of BCEBlurWithLogitsLoss.forward(pred, true)."""
    assert pred.shape == true.shape
    n = pred.size

    # Repack to a lane-dense (rows, 128) slab, rows padded to a multiple of 8,
    # so the single VMEM block is (8,128)-tile dense.
    tile = _SUBLANES * _LANES
    n_pad = pl.cdiv(n, tile) * tile
    rows = n_pad // _LANES

    def to_slab(a):
        flat = a.reshape(-1).astype(jnp.float32)
        if n_pad != n:
            flat = jnp.pad(flat, (0, n_pad - n))
        return flat.reshape(rows, _LANES)

    pred2d = to_slab(pred)
    true2d = to_slab(true)

    out = pl.pallas_call(
        functools.partial(_bce_blur_kernel, n_valid=n, alpha=float(alpha)),
        out_shape=jax.ShapeDtypeStruct((1, 1), jnp.float32),
        in_specs=[
            pl.BlockSpec(memory_space=pltpu.MemorySpace.VMEM),
            pl.BlockSpec(memory_space=pltpu.MemorySpace.VMEM),
        ],
        out_specs=pl.BlockSpec(memory_space=pltpu.MemorySpace.SMEM),
    )(pred2d, true2d)

    return out[0, 0]


class BCEBlurWithLogitsLoss:
    """JAX/Pallas equivalent of the PyTorch BCEBlurWithLogitsLoss module."""

    def __init__(self, alpha: float = 0.05):
        self.alpha = alpha

    def forward(self, pred: jax.Array, true: jax.Array) -> jax.Array:
        return bce_blur_with_logits_loss(pred, true, self.alpha)

    __call__ = forward


def _reference(pred, true, alpha=0.05):
    # Pure-JAX reference mirroring the PyTorch module.
    x, y = pred.astype(jnp.float32), true.astype(jnp.float32)
    loss = jnp.maximum(x, 0.0) - x * y + jnp.log1p(jnp.exp(-jnp.abs(x)))
    p = jax.nn.sigmoid(x)
    dx = p - y
    alpha_factor = 1.0 - jnp.exp((dx - 1.0) / (alpha + 1e-4))
    return jnp.mean(loss * alpha_factor)


if __name__ == "__main__":
    key = jax.random.PRNGKey(0)
    k1, k2 = jax.random.split(key)

    shape = (2, 4, 16, 16)  # batch=2, channels=4, spatial=16x16 -> 2048 elems
    pred = jax.random.normal(k1, shape, dtype=jnp.float32)
    true = (jax.random.uniform(k2, shape) > 0.5).astype(jnp.float32)

    module = BCEBlurWithLogitsLoss(alpha=0.05)
    out = module(pred, true)
    out = jax.block_until_ready(out)

    expected = _reference(pred, true, alpha=0.05)
    assert out.shape == ()
    assert out.dtype == jnp.float32
    assert bool(jnp.allclose(out, expected, rtol=1e-5, atol=1e-6)), (out, expected)

    print("KERNEL_OK")
</pallas_src>

<mosaic_0001>
module attributes {stable_mosaic.version = 11 : i64} {
  func.func @_bce_blur_kernel(%arg0: memref<16x128xf32, #tpu.memory_space<vmem>>, %arg1: memref<16x128xf32, #tpu.memory_space<vmem>>, %arg2: memref<1x1xf32, #tpu.memory_space<smem>>) attributes {dimension_semantics = [], scalar_prefetch = 0 : i64, scratch_operands = 0 : i64, tpu.core_type = #tpu.core_type<tc>} {
    %c0 = arith.constant 0 : index
    %c0_0 = arith.constant 0 : index
    %0 = vector.load %arg0[%c0, %c0_0] : memref<16x128xf32, #tpu.memory_space<vmem>>, vector<16x128xf32>
    %c0_1 = arith.constant 0 : index
    %c0_2 = arith.constant 0 : index
    %1 = vector.load %arg1[%c0_1, %c0_2] : memref<16x128xf32, #tpu.memory_space<vmem>>, vector<16x128xf32>
    %cst = arith.constant 0.000000e+00 : f32
    %2 = vector.broadcast %cst : f32 to vector<16x128xf32>
    %3 = arith.maximumf %0, %2 : vector<16x128xf32>
    %4 = arith.mulf %0, %1 : vector<16x128xf32>
    %5 = arith.subf %3, %4 : vector<16x128xf32>
    %6 = math.absf %0 : vector<16x128xf32>
    %cst_3 = arith.constant 0.000000e+00 : f32
    %7 = vector.broadcast %cst_3 : f32 to vector<16x128xf32>
    %8 = arith.subf %7, %6 : vector<16x128xf32>
    %9 = math.exp %8 : vector<16x128xf32>
    %cst_4 = arith.constant 1.000000e+00 : f32
    %10 = vector.broadcast %cst_4 : f32 to vector<16x128xf32>
    %11 = arith.addf %10, %9 : vector<16x128xf32>
    %12 = math.log %11 : vector<16x128xf32>
    %13 = arith.addf %5, %12 : vector<16x128xf32>
    %cst_5 = arith.constant 0.000000e+00 : f32
    %14 = vector.broadcast %cst_5 : f32 to vector<16x128xf32>
    %15 = arith.subf %14, %0 : vector<16x128xf32>
    %16 = math.exp %15 : vector<16x128xf32>
    %cst_6 = arith.constant 1.000000e+00 : f32
    %17 = vector.broadcast %cst_6 : f32 to vector<16x128xf32>
    %18 = arith.addf %17, %16 : vector<16x128xf32>
    %cst_7 = arith.constant 1.000000e+00 : f32
    %19 = vector.broadcast %cst_7 : f32 to vector<16x128xf32>
    %20 = arith.divf %19, %18 : vector<16x128xf32>
    %21 = arith.subf %20, %1 : vector<16x128xf32>
    %cst_8 = arith.constant 1.000000e+00 : f32
    %22 = vector.broadcast %cst_8 : f32 to vector<16x128xf32>
    %23 = arith.subf %21, %22 : vector<16x128xf32>
    %cst_9 = arith.constant 5.010000e-02 : f32
    %24 = vector.broadcast %cst_9 : f32 to vector<16x128xf32>
    %25 = arith.divf %23, %24 : vector<16x128xf32>
    %26 = math.exp %25 : vector<16x128xf32>
    %cst_10 = arith.constant 1.000000e+00 : f32
    %27 = vector.broadcast %cst_10 : f32 to vector<16x128xf32>
    %28 = arith.subf %27, %26 : vector<16x128xf32>
    %29 = arith.mulf %13, %28 : vector<16x128xf32>
    %30 = vector.shape_cast %29 : vector<16x128xf32> to vector<1x16x128xf32>
    %cst_11 = arith.constant dense<0.000000e+00> : vector<1xf32>
    %31 = vector.multi_reduction <add>, %30, %cst_11 [1, 2] : vector<1x16x128xf32> to vector<1xf32>
    %32 = vector.shape_cast %31 : vector<1xf32> to vector<1x1x1xf32>
    %33 = vector.extract %32[0, 0, 0] : f32 from vector<1x1x1xf32>
    %cst_12 = arith.constant 4.8828125E-4 : f32
    %34 = arith.mulf %33, %cst_12 : f32
    %c0_13 = arith.constant 0 : index
    %c0_14 = arith.constant 0 : index
    %35 = memref.load %arg2[%c0_13, %c0_14] : memref<1x1xf32, #tpu.memory_space<smem>>
    memref.store %34, %arg2[%c0_13, %c0_14] : memref<1x1xf32, #tpu.memory_space<smem>>
    return
  }
}

</mosaic_0001>

<llo_original>
// kernel: tpu_custom_call.1
$region0: #{tpu_custom_call.1}
  #allocation0 [shape = 'u32[]', space=smem, size = 0x4, offset = 0x4, fixed_abs, tag = 'smem constant byte address 0x4 - core index']
  #allocation1 [shape = 'u32[144,128]{1,0:T(1,128)}', space=vmem, size = 0x12000, scoped, tag = 'internal scratch']
  %s0 = inlined_call_operand.hbm [shape: f32[16,128], index: 0, kind: input, shape index: {}]
  %s1 = inlined_call_operand.hbm [shape: f32[16,128], index: 1, kind: input, shape index: {}]
  %s2 = inlined_call_operand.hbm [shape: f32[1,1], index: 2, kind: output, shape index: {}]
  %s3 = sld [smem:[#allocation0]]
  $region26: #{tpu_custom_call.1} parent=0
    _
  %s5 = ssub.s32 1, %s3
  %s6 = scalar_select 0, %s5, %s3
  $region1: #{tpu_custom_call.1} parent=0
    #allocation2 [shape = 'u8[8192]{0}', space=vmem, size = 0x2000, scoped, tag = 'input window, operand 0, single buffered']
    #allocation3 [shape = 's32[1]{0}', space=sflag, size = 0x4, scoped, tag = 'scoped memory for tpu_custom_call.1']
    #allocation4 [shape = 's32[1]{0}', space=sflag, size = 0x4, scoped, tag = 'scoped memory for tpu_custom_call.1']
    #allocation5 [shape = 'u8[8192]{0}', space=vmem, size = 0x2000, scoped, tag = 'input window, operand 1, single buffered']
    #allocation6 [shape = 's32[1]{0}', space=sflag, size = 0x4, scoped, tag = 'scoped memory for tpu_custom_call.1']
    #allocation7 [shape = 'u8[512]{0}', space=smem, size = 0x200, scoped, tag = 'output window, operand 0, single buffered']
    %7 = vsyncpa [#allocation3], 0
    %8 = vsyncpa [#allocation6], 0
    %9 = vsyncpa [#allocation4], 0
    // Predicated region
    $region2: #{tpu_custom_call.1} parent=1 // pred_check
      _
    $region3: #{tpu_custom_call.1} parent=1 // pred_check_branch
      %11 = sbr.rel (0) target = $region5
    $region4: #{tpu_custom_call.1} parent=1 // pred_region
      %s13 = ssub.s32 256, 256
      %14 = vsyncadd [#allocation3], %s13
      %s15 = sshll.u32 [#allocation2], 4
      %s16 = int_to_ptr.vmem [resolvable:$true] %s15
      %21 = dma.hbm_to_vmem [thread:$0]  %s0, 256, %s16, [#allocation3], 128, 128, 8
    $region5: #{tpu_custom_call.1} parent=1 // pred_fallthru
      _
    // Predicated region
    $region6: #{tpu_custom_call.1} parent=1 // pred_check
      _
    $region7: #{tpu_custom_call.1} parent=1 // pred_check_branch
      %23 = sbr.rel (0) target = $region9
    $region8: #{tpu_custom_call.1} parent=1 // pred_region
      %s25 = ssub.s32 256, 256
      %26 = vsyncadd [#allocation6], %s25
      %s27 = sshll.u32 [#allocation5], 4
      %s28 = int_to_ptr.vmem [resolvable:$true] %s27
      %33 = dma.hbm_to_vmem [thread:$0]  %s1, 256, %s28, [#allocation6], 128, 128, 8
    $region9: #{tpu_custom_call.1} parent=1 // pred_fallthru
      _
    // Predicated region
    $region10: #{tpu_custom_call.1} parent=1 // pred_check
      _
    $region11: #{tpu_custom_call.1} parent=1 // pred_check_branch
      %35 = sbr.rel (0) target = $region13
    $region12: #{tpu_custom_call.1} parent=1 // pred_region
      %36 = dma.done [#allocation3], 256
    $region13: #{tpu_custom_call.1} parent=1 // pred_fallthru
      _
    // Predicated region
    $region14: #{tpu_custom_call.1} parent=1 // pred_check
      _
    $region15: #{tpu_custom_call.1} parent=1 // pred_check_branch
      %38 = sbr.rel (0) target = $region17
    $region16: #{tpu_custom_call.1} parent=1 // pred_region
      %39 = dma.done [#allocation6], 256
    $region17: #{tpu_custom_call.1} parent=1 // pred_fallthru
      _
    %v40 = vld [vmem:[#allocation2] sm:$0xff]
    %v41 = vld [vmem:[#allocation2 + $0x8] sm:$0xff]
    %v42 = vld [vmem:[#allocation5] sm:$0xff]
    %v43 = vld [vmem:[#allocation5 + $0x8] sm:$0xff]
    %v44 = vmax.f32 %v40, 0.0
    %v45 = vmax.f32 %v41, 0.0
    %v46 = vmul.f32 %v40, %v42
    %v47 = vmul.f32 %v41, %v43
    %v48 = vsub.f32 %v44, %v46
    %v49 = vsub.f32 %v45, %v47
    %v50 = vand.u32 2147483647, %v40
    %v51 = vand.u32 2147483647, %v41
    %v52 = vsub.f32 0.0, %v50
    %v53 = vsub.f32 0.0, %v51
    %v54 = vmul.f32 %v52, 1.442695
    %v55 = vpow.pop %v54
    %v56 = vmul.f32 %v53, 1.442695
    %v57 = vpow.pop %v56
    %v58 = vadd.f32 %v55, 1.0
    %v59 = vadd.f32 %v57, 1.0
    %v60 = vlog2.pop %v58
    %v61 = vmul.f32 %v60, 0.6931472
    %v62 = vlog2.pop %v59
    %v63 = vmul.f32 %v62, 0.6931472
    %v64 = vadd.f32 %v48, %v61
    %v65 = vadd.f32 %v49, %v63
    %v66 = vsub.f32 0.0, %v40
    %v67 = vsub.f32 0.0, %v41
    %v68 = vmul.f32 %v66, 1.442695
    %v69 = vpow.pop %v68
    %v70 = vmul.f32 %v67, 1.442695
    %v71 = vpow.pop %v70
    %v72 = vadd.f32 %v69, 1.0
    %v73 = vadd.f32 %v71, 1.0
    %v74 = vrcp.pop %v72
    %v75 = vmul.f32 1.0, %v74
    %v76 = vrcp.pop %v73
    %v77 = vmul.f32 1.0, %v76
    %v78 = vsub.f32 %v75, %v42
    %v79 = vsub.f32 %v77, %v43
    %v80 = vsub.f32 %v78, 1.0
    %v81 = vsub.f32 %v79, 1.0
    %v82 = vrcp.pop 0.0501
    %v83 = vmul.f32 %v80, %v82
    %v84 = vmul.f32 %v81, %v82
    %v85 = vmul.f32 %v83, 1.442695
    %v86 = vpow.pop %v85
    %v87 = vmul.f32 %v84, 1.442695
    %v88 = vpow.pop %v87
    %v89 = vsub.f32 1.0, %v86
    %v90 = vsub.f32 1.0, %v88
    %v91 = vmul.f32 %v64, %v89
    %v92 = vmul.f32 %v65, %v90
    %v93 = vadd.f32 %v91, %v92
    %94 = vadd.xlane.f32.xlu0 %v93
    %v95 = vpop.xlane.xlu0 %94
    %v96 = vrot.slane %v95, 4
    %v97 = vadd.f32 %v95, %v96
    %v98 = vrot.slane %v97, 2
    %v99 = vadd.f32 %v97, %v98
    %v100 = vrot.slane %v99, 1
    %v101 = vadd.f32 %v99, %v100
    %s102 = vtos %v101
    %s103 = smul.f32 %s102, 0.00048828125
    %s104 = scalar_lea.smem [#allocation7], 0
    %105 = sst [smem:[%s104]] %s103
    // Predicated region
    $region18: #{tpu_custom_call.1} parent=1 // pred_check
      _
    $region19: #{tpu_custom_call.1} parent=1 // pred_check_branch
      %107 = sbr.rel (0) target = $region21
    $region20: #{tpu_custom_call.1} parent=1 // pred_region
      %s109 = ssub.s32 16, 16
      %110 = vsyncadd [#allocation4], %s109
      %113 = dma.smem_to_hbm [#allocation7], 16, %s2, [#allocation4]
    $region21: #{tpu_custom_call.1} parent=1 // pred_fallthru
      _
    // Predicated region
    $region22: #{tpu_custom_call.1} parent=1 // pred_check
      _
    $region23: #{tpu_custom_call.1} parent=1 // pred_check_branch
      %115 = sbr.rel (0) target = $region25
    $region24: #{tpu_custom_call.1} parent=1 // pred_region
      %116 = dma.done [#allocation4], 16
    $region25: #{tpu_custom_call.1} parent=1 // pred_fallthru
      _
    %117 = sfence
    %118 = vsyncpa [#allocation3], 1
    %119 = vsyncpa [#allocation6], 1
    %120 = vsyncpa [#allocation4], 1

</llo_original>
